<compile_context>
chip_gen: v5e
topology: v5e:2x2
jax: 0.10.0
libtpu: 0.0.40
codegen_flags: <defaults>
</compile_context>

<pallas_src>
import functools
import math

import jax
import jax.numpy as jnp
from jax.experimental import pallas as pl
from jax.experimental.pallas import tpu as pltpu


def _crelu_rows_kernel(x_ref, o_ref, *, aligned):
    """x_ref: (tn, cols); o_ref: (tn, 2*cols)."""
    cols = x_ref.shape[-1]
    x = x_ref[...]
    r = jnp.maximum(x, 0)          # relu(x)
    n = r - x                      # relu(-x) == relu(x) - x
    if aligned:
        # cols % 128 == 0: both stores start at 128-aligned lane offsets ->
        # unmasked full-width vst.
        o_ref[:, :cols] = r
        o_ref[:, cols:] = n
    else:
        # Unaligned feature width: concatenate in registers and do a single
        # aligned full-tile store (avoids misaligned masked stores).
        o_ref[...] = jnp.concatenate([r, n], axis=-1)


def _crelu_cols_kernel(x_ref, o_ref):
    """x_ref/o_ref: (rows, tc); grid axis 1 selects the relu(x)/relu(-x) half."""
    x = x_ref[...]
    x = jnp.where(pl.program_id(1) == 0, x, -x)
    o_ref[...] = jnp.maximum(x, 0)


def _vmem_budget():
    """Generation-aware (budget for live tiles, scoped vmem limit) in bytes."""
    cap = 64 << 20  # conservative default: v7x per-TensorCore VMEM
    try:
        cap = int(getattr(pltpu.get_tpu_info(), "vmem_capacity_bytes", cap))
    except Exception:
        pass
    budget = min(cap * 2 // 5, 32 << 20)   # double-buffered in+out footprint
    limit = min(cap * 3 // 4, 96 << 20)    # scoped limit handed to Mosaic
    return budget, limit


def concatenated_relu(x, feature_dim=1):
    """Pallas equivalent of torch.cat([relu(x), relu(-x)], dim=feature_dim)."""
    shape = x.shape
    fd = feature_dim % len(shape)
    rows = math.prod(shape[:fd])
    cols = math.prod(shape[fd:])

    x2 = x.reshape(rows, cols)
    itemsize = jnp.dtype(x.dtype).itemsize
    sub = max(8, 32 // max(itemsize, 1))   # sublane packing: 8/16/32 for 4/2/1B
    budget, vmem_limit = _vmem_budget()

    # Largest sublane-aligned row tile whose double-buffered in+out footprint
    # (~6 * tn * cols * itemsize) fits the budget.
    max_tn = (budget // (6 * cols * itemsize)) // sub * sub
    use_rows = rows >= 2 * sub and max_tn >= sub
    use_cols = (not use_rows and cols % 128 == 0
                and 4 * rows * 128 * itemsize <= budget)

    bytes_accessed = 3 * rows * cols * itemsize
    out_struct = jax.ShapeDtypeStruct((rows, 2 * cols), x.dtype)

    if use_cols:
        # Half-selector grid: axis 1 picks relu(x) vs relu(-x); every output
        # block is a lane-dense (rows, tc) slab at a 128-aligned offset, and
        # even tiny inputs get >= 2 grid steps for megacore / DMA overlap.
        q = cols // 128
        d_cap = max(1, budget // (4 * rows * 128 * itemsize))
        d = 1
        for cand in range(min(q, d_cap), 0, -1):
            if q % cand == 0:
                d = cand
                break
        tc = 128 * d
        ncb = cols // tc
        out2 = pl.pallas_call(
            _crelu_cols_kernel,
            out_shape=out_struct,
            grid_spec=pltpu.PrefetchScalarGridSpec(
                num_scalar_prefetch=0,
                grid=(ncb, 2),
                in_specs=[pl.BlockSpec((rows, tc), lambda j, h: (0, j))],
                out_specs=pl.BlockSpec((rows, tc),
                                       lambda j, h: (0, j + h * ncb)),
            ),
            compiler_params=pltpu.CompilerParams(
                dimension_semantics=("parallel", "parallel"),
                vmem_limit_bytes=vmem_limit,
            ),
            cost_estimate=pl.CostEstimate(
                flops=2 * rows * cols, transcendentals=0,
                bytes_accessed=bytes_accessed + rows * cols * itemsize),
        )(x2)
    else:
        if use_rows:
            # Balanced row tiling: even step count (v7x two-TC sharding),
            # tiles sized by the VMEM budget (no artificial 512-row cap).
            n_steps = max(2, pl.cdiv(rows, max_tn))
            if n_steps % 2:
                n_steps += 1
            tn = pl.cdiv(pl.cdiv(rows, n_steps), sub) * sub
            grid = (pl.cdiv(rows, tn),)
        else:
            # Tiny / oddly-shaped input: single full block.
            # TODO(synk): rows < 2*sub with huge, non-128-aligned cols is not
            # column-tiled and could exceed the VMEM limit.
            tn = rows
            grid = (1,)
        kernel = functools.partial(_crelu_rows_kernel,
                                   aligned=(cols % 128 == 0))
        out2 = pl.pallas_call(
            kernel,
            out_shape=out_struct,
            grid_spec=pltpu.PrefetchScalarGridSpec(
                num_scalar_prefetch=0,
                grid=grid,
                in_specs=[pl.BlockSpec((tn, cols), lambda i: (i, 0))],
                out_specs=pl.BlockSpec((tn, 2 * cols), lambda i: (i, 0)),
            ),
            compiler_params=pltpu.CompilerParams(
                dimension_semantics=("parallel",),
                vmem_limit_bytes=vmem_limit,
            ),
            cost_estimate=pl.CostEstimate(
                flops=2 * rows * cols, transcendentals=0,
                bytes_accessed=bytes_accessed),
        )(x2)

    out_shape = shape[:fd] + (2 * shape[fd],) + shape[fd + 1:]
    return out2.reshape(out_shape)


if __name__ == "__main__":
    def _reference(x, fd):
        return jnp.concatenate([jnp.maximum(x, 0), jnp.maximum(-x, 0)], axis=fd)

    key = jax.random.PRNGKey(0)
    cases = [
        # (shape, dtype, feature_dim)
        ((2, 4, 16, 16), jnp.float32, 1),    # half-selector path, grid (1, 2)
        ((600, 4, 16, 16), jnp.float32, 1),  # balanced row path (304 + 296)
        ((32, 3, 8, 8), jnp.float32, 1),     # row path, cols not 128-aligned
        ((2, 4, 16, 16), jnp.bfloat16, 1),   # half-selector path, bf16
        ((2, 3, 8, 8), jnp.float32, 1),      # degenerate single-block path
        ((2, 4, 32), jnp.float32, -1),       # negative feature_dim
    ]
    for i, (shp, dt, fd) in enumerate(cases):
        key, k = jax.random.split(key)
        x = jax.random.normal(k, shp, dtype=dt)
        y = jax.block_until_ready(concatenated_relu(x, feature_dim=fd))
        r = _reference(x, fd % len(shp))
        assert y.shape == r.shape, (i, y.shape, r.shape)
        assert jnp.allclose(y, r), f"mismatch on case {i}: {shp} {dt} fd={fd}"
    print("KERNEL_OK")
</pallas_src>

<mosaic_0001>
module attributes {stable_mosaic.version = 11 : i64} {
  func.func @_crelu_cols_kernel(%arg0: i32, %arg1: i32, %arg2: memref<2x1024xf32, #tpu.memory_space<vmem>>, %arg3: memref<2x1024xf32, #tpu.memory_space<vmem>>) attributes {dimension_semantics = [#tpu.dimension_semantics<parallel>, #tpu.dimension_semantics<parallel>], iteration_bounds = array<i64: 1, 2>, scalar_prefetch = 0 : i64, scratch_operands = 0 : i64, tpu.core_type = #tpu.core_type<tc>, window_params = [{transform_indices = @transform_0, window_bounds = array<i64: 2, 1024>}, {transform_indices = @transform_1, window_bounds = array<i64: 2, 1024>}]} {
    %c0 = arith.constant 0 : index
    %c0_0 = arith.constant 0 : index
    %0 = vector.load %arg2[%c0, %c0_0] : memref<2x1024xf32, #tpu.memory_space<vmem>>, vector<2x1024xf32>
    %c0_i32 = arith.constant 0 : i32
    %1 = arith.cmpi eq, %arg1, %c0_i32 : i32
    %cst = arith.constant 0.000000e+00 : f32
    %2 = vector.broadcast %cst : f32 to vector<2x1024xf32>
    %3 = arith.subf %2, %0 : vector<2x1024xf32>
    %4 = arith.select %1, %0, %3 : vector<2x1024xf32>
    %cst_1 = arith.constant 0.000000e+00 : f32
    %5 = vector.broadcast %cst_1 : f32 to vector<2x1024xf32>
    %6 = arith.maximumf %4, %5 : vector<2x1024xf32>
    %c0_2 = arith.constant 0 : index
    %c0_3 = arith.constant 0 : index
    %7 = vector.load %arg3[%c0_2, %c0_3] : memref<2x1024xf32, #tpu.memory_space<vmem>>, vector<2x1024xf32>
    tpu.vector_store %arg3[%c0_2, %c0_3], %6 {strides = array<i32>} : memref<2x1024xf32, #tpu.memory_space<vmem>>, vector<2x1024xf32>,
    return
  }
  func.func @transform_0(%arg0: i32, %arg1: i32) -> (i32, i32) {
    %c0_i32 = arith.constant 0 : i32
    %c0_i32_0 = arith.constant 0 : i32
    return %c0_i32, %arg0 : i32, i32
  }
  func.func @transform_1(%arg0: i32, %arg1: i32) -> (i32, i32) {
    %c1_i32 = arith.constant 1 : i32
    %0 = arith.muli %arg1, %c1_i32 : i32
    %1 = arith.addi %arg0, %0 : i32
    %c0_i32 = arith.constant 0 : i32
    %c0_i32_0 = arith.constant 0 : i32
    return %c0_i32, %1 : i32, i32
  }
}

</mosaic_0001>

<llo_original>
// kernel: tpu_custom_call.1
$region0: #{tpu_custom_call.1}
  #allocation0 [shape = 'u32[]', space=smem, size = 0x4, offset = 0x4, fixed_abs, tag = 'smem constant byte address 0x4 - core index']
  #allocation1 [shape = 'u32[72,128]{1,0:T(1,128)}', space=vmem, size = 0x9000, scoped, tag = 'internal scratch']
  %s0 = inlined_call_operand.hbm [shape: f32[2,1024], index: 0, kind: input, shape index: {}]
  %s1 = inlined_call_operand.hbm [shape: f32[2,2048], index: 1, kind: output, shape index: {}]
  %s2 = sld [smem:[#allocation0]]
  $region41: #{tpu_custom_call.1} parent=0
    _
  %s4 = ssub.s32 1, %s2
  %s5 = scalar_select 0, %s4, %s2
  $region1: #{tpu_custom_call.1} parent=0
    #allocation2 [shape = 'u8[8192]{0}', space=vmem, size = 0x2000, scoped, tag = 'input window, operand 0, single buffered']
    #allocation3 [shape = 's32[2]{0}', space=sflag, size = 0x8, scoped, tag = 'scoped memory for tpu_custom_call.1']
    #allocation4 [shape = 's32[2]{0}', space=sflag, size = 0x8, scoped, tag = 'scoped memory for tpu_custom_call.1']
    #allocation5 [shape = 'u8[16384]{0}', space=vmem, size = 0x4000, scoped, tag = 'output window, operand 0']
    %6 = vsyncpa [#allocation3], 0
    %7 = vsyncpa [#allocation4], 0
    %s8 = scalar_lea.sflag [#allocation4], 1
    %9 = vsyncpa %s8, 0
    loop: start=0, step=1, limit=4
    $region2: #{tpu_custom_call.1} parent=1 // loop_pre_header
      _
    $region3: #{tpu_custom_call.1} parent=1 // loop_header
      %s11 = sphi 0, %s15
      %p12 = scmp.ge.s32.totalorder %s11, 4
      %s18 = sphi 0, %s30
      %s19 = sphi 0, %s26
      %s20 = sphi 0, %s18
      %s21 = sphi 0, %s19
      %s22 = sphi 0, %s20
      %s23 = sphi 0, %s21
      %s33 = sphi 0, %s35
      %s36 = sphi 0, %s33
      %s37 = sphi 0, %s36
      %s53 = sphi 0, %s37
      %s61 = sphi 0, %s63
      %s64 = sphi 0, %s61
      %s65 = sphi 0, %s64
      %s81 = sphi 0, %s65
    $region4: #{tpu_custom_call.1} parent=1 // loop_header_branch
      %14 = sbr.rel (%p12) target = $region8
    $region5: #{tpu_custom_call.1} parent=1 // loop_body
      %s16 = ssub.s32 %s11, 1
      %s17 = ssub.s32 %s11, 2
      %s24 = sadd.s32 1, %s19
      %p25 = scmp.ge.s32.totalorder %s24, 2
      %s26 = scalar_select %p25, 0, %s24
      %s27 = sadd.s32 1, %s18
      %s28 = scalar_select %p25, %s27, %s18
      %p29 = scmp.ge.s32.totalorder %s28, 1
      %s30 = scalar_select %p29, 0, %s28
      %s31 = ssub.s32 %s18, %s30
      %p32 = scmp.eq.s32.totalorder %s31, 0
      %s34 = sadd.s32 %s33, 1
      %s35 = scalar_select %p32, %s33, %s34
      %p38 = pneg %p32
      %p39 = scmp.eq.s32.totalorder %s11, 1
      %p40 = por %p38, %p39
      %p41 = scmp.ne.s32.totalorder %s33, %s36
      %p42 = scmp.eq.s32.totalorder %s11, 0
      %p43 = por %p41, %p42
      %p44 = scmp.ne.s32.totalorder %s33, %s36
      %p45 = scmp.eq.s32.totalorder %s16, 1
      %p46 = por %p44, %p45
      %p47 = scmp.ne.s32.totalorder %s36, %s37
      %p48 = scmp.eq.s32.totalorder %s16, 0
      %p49 = por %p47, %p48
      %p50 = scmp.ne.s32.totalorder %s36, %s37
      %p51 = scmp.eq.s32.totalorder %s17, 1
      %p52 = por %p50, %p51
      %p54 = scmp.ne.s32.totalorder %s37, %s53
      %p55 = scmp.eq.s32.totalorder %s17, 0
      %p56 = por %p54, %p55
      %s57 = sadd.s32 %s18, %s19
      %s58 = sadd.s32 %s30, %s26
      %s59 = ssub.s32 %s57, %s58
      %p60 = scmp.eq.s32.totalorder %s59, 0
      %s62 = sadd.s32 %s61, 1
      %s63 = scalar_select %p60, %s61, %s62
      %p66 = pneg %p60
      %p67 = scmp.eq.s32.totalorder %s11, 1
      %p68 = por %p66, %p67
      %p69 = scmp.ne.s32.totalorder %s61, %s64
      %p70 = scmp.eq.s32.totalorder %s11, 0
      %p71 = por %p69, %p70
      %p72 = scmp.ne.s32.totalorder %s61, %s64
      %p73 = scmp.eq.s32.totalorder %s16, 1
      %p74 = por %p72, %p73
      %p75 = scmp.ne.s32.totalorder %s64, %s65
      %p76 = scmp.eq.s32.totalorder %s16, 0
      %p77 = por %p75, %p76
      %p78 = scmp.ne.s32.totalorder %s64, %s65
      %p79 = scmp.eq.s32.totalorder %s17, 1
      %p80 = por %p78, %p79
      %p82 = scmp.ne.s32.totalorder %s65, %s81
      %p83 = scmp.eq.s32.totalorder %s17, 0
      %p84 = por %p82, %p83
      %p85 = scmp.le.s32.totalorder 1, %s11
      %p86 = scmp.lt.s32.totalorder %s11, 3
      %p87 = pnand %p85, %p86
      %p88 = pneg %p87
      // Predicated region
      $region9: #{tpu_custom_call.1} parent=5 // pred_check
        _
      $region10: #{tpu_custom_call.1} parent=5 // pred_check_branch
        %90 = sbr.rel (%p87) target = $region12
      $region11: #{tpu_custom_call.1} parent=5 // pred_region
        %s91 = ssub.s32 %s11, 1
        // Predicated region
        $region13: #{tpu_custom_call.1} parent=11 // pred_check
          %p92 = pneg %p49
        $region14: #{tpu_custom_call.1} parent=11 // pred_check_branch
          %94 = sbr.rel (%p92) target = $region16
        $region15: #{tpu_custom_call.1} parent=11 // pred_region
          %s95 = smul.u32 8, %s20
          %97 = vsyncadd [#allocation3], 0
          %s98 = smul.addr %s95, 2
          %s99 = scalar_lea.hbm %s0, %s98
          %s101 = sshll.u32 %s99, 4
          %s102 = int_to_ptr.hbm [resolvable:$true] %s101
          %s103 = sshll.u32 [#allocation2], 4
          %s104 = int_to_ptr.vmem [resolvable:$true] %s103
          %106 = dma.hbm_to_vmem [thread:$0]  %s102, 256, %s104, [#allocation3]
        $region16: #{tpu_custom_call.1} parent=11 // pred_fallthru
          _
      $region12: #{tpu_custom_call.1} parent=5 // pred_fallthru
        _
      %p107 = scmp.lt.s32.totalorder %s11, 2
      // Predicated region
      $region17: #{tpu_custom_call.1} parent=5 // pred_check
        %p108 = pneg %p107
      $region18: #{tpu_custom_call.1} parent=5 // pred_check_branch
        %110 = sbr.rel (%p108) target = $region20
      $region19: #{tpu_custom_call.1} parent=5 // pred_region
        _
      $region20: #{tpu_custom_call.1} parent=5 // pred_fallthru
        _
      %p111 = scmp.le.s32.totalorder 1, %s11
      %p112 = scmp.lt.s32.totalorder %s11, 3
      %p113 = pnand %p111, %p112
      %p114 = pneg %p113
      // Predicated region
      $region21: #{tpu_custom_call.1} parent=5 // pred_check
        _
      $region22: #{tpu_custom_call.1} parent=5 // pred_check_branch
        %116 = sbr.rel (%p113) target = $region24
      $region23: #{tpu_custom_call.1} parent=5 // pred_region
        %s117 = ssub.s32 %s11, 1
        // Predicated region
        $region25: #{tpu_custom_call.1} parent=23 // pred_check
          %p118 = pneg %p49
        $region26: #{tpu_custom_call.1} parent=23 // pred_check_branch
          %120 = sbr.rel (%p118) target = $region28
        $region27: #{tpu_custom_call.1} parent=23 // pred_region
          %122 = dma.done [#allocation3], 256
        $region28: #{tpu_custom_call.1} parent=23 // pred_fallthru
          _
        %p123 = pneg %p49
        %p124 = pneg %p46
        %p125 = pneg %p77
        %p126 = pneg %p74
        %s127 = sand.u32 %s64, 1
        %s128 = scalar_lea.sflag [#allocation4], %s127
        %s129 = sand.u32 %s64, 1
        %s130 = smul.addr %s129, 16
        %s131 = scalar_lea.vmem [#allocation5], %s130
        %s132 = smul.u32 8, %s20
        %s133 = sadd.s32 %s20, %s21
        %s134 = smul.u32 8, %s133
        %v135 = vld [vmem:[#allocation2] sm:$0xff]
        %v136 = vld [vmem:[#allocation2 + $0x8] sm:$0xff]
        %p137 = scmp.eq.s32.totalorder %s21, 0
        %v138 = vsub.f32 0.0, %v135
        %v139 = vsub.f32 0.0, %v136
        %s140 = scalar_select %p137, 1, 0
        %v141 = vstv %s140
        %vm142 = vcmp.eq.s32.totalorder %v141, 1
        %v143 = vsel %vm142, %v135, %v138
        %v144 = vsel %vm142, %v136, %v139
        %v145 = vmax.f32 %v143, 0.0
        %v146 = vmax.f32 %v144, 0.0
        %147 = vst [vmem:[%s131] sm:$0xff] %v145
        %148 = vst [vmem:[%s131 + $0x8] sm:$0xff] %v146
        %s149 = sand.u32 %s64, 1
        %s150 = scalar_lea.sflag [#allocation4], %s149
        %s151 = sand.u32 %s64, 1
        %s152 = smul.addr %s151, 16
        %s153 = scalar_lea.vmem [#allocation5], %s152
        // Predicated region
        $region29: #{tpu_custom_call.1} parent=23 // pred_check
          %p154 = pneg %p74
        $region30: #{tpu_custom_call.1} parent=23 // pred_check_branch
          %156 = sbr.rel (%p154) target = $region32
        $region31: #{tpu_custom_call.1} parent=23 // pred_region
          %s157 = sadd.s32 %s20, %s21
          %s158 = smul.u32 8, %s157
          %160 = vsyncadd %s150, 0
          %s161 = smul.addr %s158, 2
          %s162 = scalar_lea.hbm %s1, %s161
          %s164 = sshll.u32 %s153, 4
          %s165 = int_to_ptr.vmem [resolvable:$true] %s164
          %s166 = sshll.u32 %s162, 4
          %s167 = int_to_ptr.hbm [resolvable:$true] %s166
          %169 = dma.vmem_to_hbm [thread:$0]  %s165, 256, %s167, %s150
        $region32: #{tpu_custom_call.1} parent=23 // pred_fallthru
          _
      $region24: #{tpu_custom_call.1} parent=5 // pred_fallthru
        _
      %p170 = scmp.le.s32.totalorder 2, %s11
      // Predicated region
      $region33: #{tpu_custom_call.1} parent=5 // pred_check
        %p171 = pneg %p170
      $region34: #{tpu_custom_call.1} parent=5 // pred_check_branch
        %173 = sbr.rel (%p171) target = $region36
      $region35: #{tpu_custom_call.1} parent=5 // pred_region
        %s174 = ssub.s32 %s11, 2
        // Predicated region
        $region37: #{tpu_custom_call.1} parent=35 // pred_check
          %p175 = pneg %p80
        $region38: #{tpu_custom_call.1} parent=35 // pred_check_branch
          %177 = sbr.rel (%p175) target = $region40
        $region39: #{tpu_custom_call.1} parent=35 // pred_region
          %s178 = sand.u32 %s65, 1
          %s179 = scalar_lea.sflag [#allocation4], %s178
          %s180 = sand.u32 %s65, 1
          %s181 = smul.addr %s180, 16
          %s182 = scalar_lea.vmem [#allocation5], %s181
          %184 = dma.done %s179, 256
        $region40: #{tpu_custom_call.1} parent=35 // pred_fallthru
          _
      $region36: #{tpu_custom_call.1} parent=5 // pred_fallthru
        _
    $region6: #{tpu_custom_call.1} parent=1 // loop_footer
      %s15 = sadd.s32 1, %s11
    $region7: #{tpu_custom_call.1} parent=1 // loop_footer_branch
      %10 = sbr.rel target = $region3
    $region8: #{tpu_custom_call.1} parent=1 // loop_exit
      _
    %185 = vsyncpa [#allocation3], 1
    %s186 = scalar_lea.sflag [#allocation3], 1
    %187 = vsyncpa %s186, 1
    %188 = vsyncpa [#allocation4], 1
    %s189 = scalar_lea.sflag [#allocation4], 1
    %190 = vsyncpa %s189, 1

</llo_original>
